<compile_context>
chip_gen: v7x
topology: tpu7x:2x2x1
jax: 0.10.0
libtpu: 0.0.40
codegen_flags: <defaults>
</compile_context>

<pallas_src>
import functools

import jax
import jax.numpy as jnp
from jax.experimental import pallas as pl
from jax.experimental.pallas import tpu as pltpu


def _fast_reciprocal(x):
    # EUP approx reciprocal (+ one Newton step -> ~2^-24 rel. error).
    r = pl.reciprocal(x, approx=True)
    return r * (2.0 - x * r)


def _per_sample_focal(alpha_ref, logits_ref, target_ref, *, gamma, eps):
    """Per-sample focal loss for one (C, TB) tile -> (1, TB) float32."""
    x = logits_ref[...].astype(jnp.float32)        # (C, TB)
    t = target_ref[...]                            # (1, TB) int32
    C = x.shape[0]

    # numerically stable softmax pieces over the class (sublane) axis
    m = jnp.max(x, axis=0, keepdims=True)          # (1, TB)
    e = jnp.exp(x - m)                             # (C, TB) -- only full-width transcendental
    denom = jnp.sum(e, axis=0, keepdims=True)      # (1, TB)

    # target-class numerator: fused select + sublane reduce (no one-hot multiply)
    class_ids = jax.lax.broadcasted_iota(jnp.int32, x.shape, 0)
    e_t = jnp.sum(jnp.where(class_ids == t, e, 0.0), axis=0, keepdims=True)   # (1, TB)

    # per-sample alpha via unrolled SMEM-scalar selects
    alpha_t = jnp.zeros(t.shape, jnp.float32)
    for c in range(C):
        alpha_t = jnp.where(t == c, alpha_ref[c], alpha_t)                    # (1, TB)

    # p_t = softmax_t + eps
    p_t = e_t * _fast_reciprocal(denom) + eps
    one_minus = 1.0 - p_t

    g = float(gamma)
    if g == 2.0:
        w = one_minus * one_minus
    elif g.is_integer() and g >= 0.0:
        w = jnp.ones_like(one_minus)
        for _ in range(int(g)):
            w = w * one_minus
    else:
        # p_t can exceed 1 (softmax + eps); clamp so a non-integer pow stays finite
        w = jnp.power(jnp.maximum(one_minus, 0.0), g)

    return -alpha_t * w * jnp.log(p_t)             # (1, TB)


def _focal_kernel_per_sample(alpha_ref, logits_ref, target_ref, out_ref, *, gamma, eps):
    out_ref[...] = _per_sample_focal(alpha_ref, logits_ref, target_ref, gamma=gamma, eps=eps)


def _focal_kernel_partial_sum(alpha_ref, logits_ref, target_ref, psum_ref, *,
                              gamma, eps, n_valid, tb):
    loss = _per_sample_focal(alpha_ref, logits_ref, target_ref, gamma=gamma, eps=eps)
    # mask padded samples so the fused partial sum is exact
    idx = jax.lax.broadcasted_iota(jnp.int32, loss.shape, 1)
    valid = (pl.program_id(0) * tb + idx) < n_valid
    tile_sum = jnp.sum(jnp.where(valid, loss, 0.0), axis=1, keepdims=True)    # (1, 1)
    psum_ref[...] = jnp.broadcast_to(tile_sum, psum_ref.shape)                # (1, 128)


def _batch_tiling(B):
    """Even, lane-aligned batch tiles; >=2 tiles when the batch is big enough."""
    TB_CAP = 65536                              # ~12 MiB VMEM/step double-buffered
    Bp = ((B + 127) // 128) * 128
    min_split = 2 if Bp >= 1024 else 1          # engage both v7x TCs, keep tiles >= 512 lanes
    n_tiles = max(-(-Bp // TB_CAP), min_split)
    TB = ((-(-Bp // n_tiles) + 127) // 128) * 128
    grid_n = -(-Bp // TB)
    return TB, grid_n, grid_n * TB


def focal_loss_pallas(logits, target, alpha, gamma=2.0, reduction="none", eps=1e-6):
    """logits: (B, C) float; target: (B,) int; alpha: (C,) float. Loss returned in f32."""
    B, C = logits.shape
    TB, grid_n, B_pad = _batch_tiling(B)

    # Single fused transpose(+minimal pad) copy: class axis -> sublanes, batch -> lanes.
    logits_t = logits.T                                       # (C, B), native dtype
    target2d = target.astype(jnp.int32).reshape(1, B)         # (1, B)
    if B_pad != B:
        logits_t = jnp.pad(logits_t, ((0, 0), (0, B_pad - B)))
        target2d = jnp.pad(target2d, ((0, 0), (0, B_pad - B)))
    alpha_sc = jnp.asarray(alpha, jnp.float32).reshape(C)     # -> SMEM via scalar prefetch

    in_specs = [
        pl.BlockSpec((C, TB), lambda i, a: (0, i)),           # logits tile (C on sublanes)
        pl.BlockSpec((1, TB), lambda i, a: (0, i)),           # target tile
    ]
    cparams = pltpu.CompilerParams(dimension_semantics=("parallel",))

    if reduction == "none":
        kernel = functools.partial(_focal_kernel_per_sample,
                                   gamma=float(gamma), eps=float(eps))
        per_sample = pl.pallas_call(
            kernel,
            out_shape=jax.ShapeDtypeStruct((1, B_pad), jnp.float32),
            grid_spec=pltpu.PrefetchScalarGridSpec(
                num_scalar_prefetch=1,
                grid=(grid_n,),
                in_specs=in_specs,
                out_specs=pl.BlockSpec((1, TB), lambda i, a: (0, i)),
            ),
            compiler_params=cparams,
        )(alpha_sc, logits_t, target2d)
        return per_sample[0, :B]                              # drop batch padding

    if reduction in ("mean", "sum"):
        kernel = functools.partial(_focal_kernel_partial_sum,
                                   gamma=float(gamma), eps=float(eps), n_valid=B, tb=TB)
        partials = pl.pallas_call(
            kernel,
            out_shape=jax.ShapeDtypeStruct((1, grid_n * 128), jnp.float32),
            grid_spec=pltpu.PrefetchScalarGridSpec(
                num_scalar_prefetch=1,
                grid=(grid_n,),
                in_specs=in_specs,
                out_specs=pl.BlockSpec((1, 128), lambda i, a: (0, i)),
            ),
            compiler_params=cparams,
        )(alpha_sc, logits_t, target2d)
        total = jnp.sum(partials.reshape(grid_n, 128)[:, 0])  # one scalar per tile
        return total / B if reduction == "mean" else total

    raise NotImplementedError(f"Invalid reduction mode: {reduction}")


class FocalLoss:
    """Mirror of the PyTorch FocalLoss module (eps = 1e-6)."""

    def __init__(self, alpha, gamma=2.0, reduction="none"):
        self.alpha = jnp.asarray(alpha, jnp.float32)
        self.gamma = gamma
        self.reduction = reduction
        self.eps = 1e-6

    def __call__(self, input, target):
        return focal_loss_pallas(input, target, self.alpha, self.gamma,
                                 self.reduction, self.eps)


def _focal_loss_ref(logits, target, alpha, gamma=2.0, eps=1e-6):
    p = jax.nn.softmax(logits.astype(jnp.float32), axis=1) + eps
    one_hot = jax.nn.one_hot(target, logits.shape[1], dtype=jnp.float32)
    focal = (-jnp.asarray(alpha, jnp.float32).reshape(1, -1)
             * jnp.power(1.0 - p, gamma) * jnp.log(p))
    return jnp.sum(one_hot * focal, axis=1)


if __name__ == "__main__":
    key = jax.random.PRNGKey(0)
    k_logits, k_target = jax.random.split(key)

    B, C = 8, 5  # Diabetic Retinopathy: 5 severity classes
    logits = jax.random.normal(k_logits, (B, C), dtype=jnp.float32)
    target = jax.random.randint(k_target, (B,), 0, C, dtype=jnp.int32)
    alpha = jnp.array([0.25, 0.5, 1.0, 1.5, 2.0], dtype=jnp.float32)

    loss_fn = FocalLoss(alpha, gamma=2.0, reduction="none")
    out = jax.block_until_ready(loss_fn(logits, target))

    ref = _focal_loss_ref(logits, target, alpha, gamma=2.0)
    if not jnp.allclose(out, ref, atol=1e-5, rtol=1e-5):
        raise AssertionError(f"mismatch: pallas={out}, ref={ref}")

    # fused mean-reduction path (per-tile partial sums in-kernel)
    mean_out = jax.block_until_ready(
        focal_loss_pallas(logits, target, alpha, gamma=2.0, reduction="mean"))
    if not jnp.allclose(mean_out, jnp.mean(ref), atol=1e-5, rtol=1e-5):
        raise AssertionError(f"mean mismatch: pallas={mean_out}, ref={jnp.mean(ref)}")

    print("KERNEL_OK")
</pallas_src>

<mosaic_0001>
module attributes {stable_mosaic.version = 11 : i64} {
  func.func @_focal_kernel_per_sample(%arg0: i32, %arg1: memref<5xf32, #tpu.memory_space<smem>>, %arg2: memref<5x128xf32, #tpu.memory_space<vmem>>, %arg3: memref<1x128xi32, #tpu.memory_space<vmem>>, %arg4: memref<1x128xf32, #tpu.memory_space<vmem>>) attributes {dimension_semantics = [#tpu.dimension_semantics<parallel>], iteration_bounds = array<i64: 1>, scalar_prefetch = 1 : i64, scratch_operands = 0 : i64, tpu.core_type = #tpu.core_type<tc>, window_params = [{transform_indices = @transform_0, window_bounds = array<i64: 5, 128>}, {transform_indices = @transform_1, window_bounds = array<i64: 1, 128>}, {transform_indices = @transform_2, window_bounds = array<i64: 1, 128>}]} {
    %c0 = arith.constant 0 : index
    %c0_0 = arith.constant 0 : index
    %0 = vector.load %arg2[%c0, %c0_0] : memref<5x128xf32, #tpu.memory_space<vmem>>, vector<5x128xf32>
    %c0_1 = arith.constant 0 : index
    %c0_2 = arith.constant 0 : index
    %1 = vector.load %arg3[%c0_1, %c0_2] : memref<1x128xi32, #tpu.memory_space<vmem>>, vector<1x128xi32>
    %cst = arith.constant dense<0xFF800000> : vector<128xf32>
    %2 = vector.multi_reduction <maximumf>, %0, %cst [0] : vector<5x128xf32> to vector<128xf32>
    %3 = vector.shape_cast %2 : vector<128xf32> to vector<1x128xf32>
    %4 = vector.broadcast %3 : vector<1x128xf32> to vector<5x128xf32>
    %5 = arith.subf %0, %4 : vector<5x128xf32>
    %6 = math.exp %5 : vector<5x128xf32>
    %cst_3 = arith.constant dense<0.000000e+00> : vector<128xf32>
    %7 = vector.multi_reduction <add>, %6, %cst_3 [0] : vector<5x128xf32> to vector<128xf32>
    %8 = vector.shape_cast %7 : vector<128xf32> to vector<1x128xf32>
    %9 = tpu.iota {dimensions = array<i32: 0>} : vector<5x128xi32>
    %10 = vector.broadcast %1 : vector<1x128xi32> to vector<5x128xi32>
    %11 = arith.cmpi eq, %9, %10 : vector<5x128xi32>
    %cst_4 = arith.constant 0.000000e+00 : f32
    %12 = vector.broadcast %cst_4 : f32 to vector<5x128xf32>
    %13 = arith.select %11, %6, %12 : vector<5x128xi1>, vector<5x128xf32>
    %cst_5 = arith.constant dense<0.000000e+00> : vector<128xf32>
    %14 = vector.multi_reduction <add>, %13, %cst_5 [0] : vector<5x128xf32> to vector<128xf32>
    %15 = vector.shape_cast %14 : vector<128xf32> to vector<1x128xf32>
    %cst_6 = arith.constant 0.000000e+00 : f32
    %16 = vector.broadcast %cst_6 : f32 to vector<1x128xf32>
    %c0_i32 = arith.constant 0 : i32
    %17 = vector.broadcast %c0_i32 : i32 to vector<1x128xi32>
    %18 = arith.cmpi eq, %1, %17 : vector<1x128xi32>
    %c0_7 = arith.constant 0 : index
    %19 = memref.load %arg1[%c0_7] : memref<5xf32, #tpu.memory_space<smem>>
    %20 = vector.broadcast %19 : f32 to vector<1x128xf32>
    %21 = arith.select %18, %20, %16 : vector<1x128xi1>, vector<1x128xf32>
    %c1_i32 = arith.constant 1 : i32
    %22 = vector.broadcast %c1_i32 : i32 to vector<1x128xi32>
    %23 = arith.cmpi eq, %1, %22 : vector<1x128xi32>
    %c1 = arith.constant 1 : index
    %24 = memref.load %arg1[%c1] : memref<5xf32, #tpu.memory_space<smem>>
    %25 = vector.broadcast %24 : f32 to vector<1x128xf32>
    %26 = arith.select %23, %25, %21 : vector<1x128xi1>, vector<1x128xf32>
    %c2_i32 = arith.constant 2 : i32
    %27 = vector.broadcast %c2_i32 : i32 to vector<1x128xi32>
    %28 = arith.cmpi eq, %1, %27 : vector<1x128xi32>
    %c2 = arith.constant 2 : index
    %29 = memref.load %arg1[%c2] : memref<5xf32, #tpu.memory_space<smem>>
    %30 = vector.broadcast %29 : f32 to vector<1x128xf32>
    %31 = arith.select %28, %30, %26 : vector<1x128xi1>, vector<1x128xf32>
    %c3_i32 = arith.constant 3 : i32
    %32 = vector.broadcast %c3_i32 : i32 to vector<1x128xi32>
    %33 = arith.cmpi eq, %1, %32 : vector<1x128xi32>
    %c3 = arith.constant 3 : index
    %34 = memref.load %arg1[%c3] : memref<5xf32, #tpu.memory_space<smem>>
    %35 = vector.broadcast %34 : f32 to vector<1x128xf32>
    %36 = arith.select %33, %35, %31 : vector<1x128xi1>, vector<1x128xf32>
    %c4_i32 = arith.constant 4 : i32
    %37 = vector.broadcast %c4_i32 : i32 to vector<1x128xi32>
    %38 = arith.cmpi eq, %1, %37 : vector<1x128xi32>
    %c4 = arith.constant 4 : index
    %39 = memref.load %arg1[%c4] : memref<5xf32, #tpu.memory_space<smem>>
    %40 = vector.broadcast %39 : f32 to vector<1x128xf32>
    %41 = arith.select %38, %40, %36 : vector<1x128xi1>, vector<1x128xf32>
    %42 = tpu.reciprocal %8 {approx = true} : vector<1x128xf32> -> vector<1x128xf32>
    %43 = arith.mulf %8, %42 : vector<1x128xf32>
    %cst_8 = arith.constant 2.000000e+00 : f32
    %44 = vector.broadcast %cst_8 : f32 to vector<1x128xf32>
    %45 = arith.subf %44, %43 : vector<1x128xf32>
    %46 = arith.mulf %42, %45 : vector<1x128xf32>
    %47 = arith.mulf %15, %46 : vector<1x128xf32>
    %cst_9 = arith.constant 9.99999997E-7 : f32
    %48 = vector.broadcast %cst_9 : f32 to vector<1x128xf32>
    %49 = arith.addf %47, %48 : vector<1x128xf32>
    %cst_10 = arith.constant 1.000000e+00 : f32
    %50 = vector.broadcast %cst_10 : f32 to vector<1x128xf32>
    %51 = arith.subf %50, %49 : vector<1x128xf32>
    %52 = arith.mulf %51, %51 : vector<1x128xf32>
    %cst_11 = arith.constant 0.000000e+00 : f32
    %53 = vector.broadcast %cst_11 : f32 to vector<1x128xf32>
    %54 = arith.subf %53, %41 : vector<1x128xf32>
    %55 = arith.mulf %54, %52 : vector<1x128xf32>
    %56 = math.log %49 : vector<1x128xf32>
    %57 = arith.mulf %55, %56 : vector<1x128xf32>
    %c0_12 = arith.constant 0 : index
    %c0_13 = arith.constant 0 : index
    %58 = vector.load %arg4[%c0_12, %c0_13] : memref<1x128xf32, #tpu.memory_space<vmem>>, vector<1x128xf32>
    tpu.vector_store %arg4[%c0_12, %c0_13], %57 {strides = array<i32>} : memref<1x128xf32, #tpu.memory_space<vmem>>, vector<1x128xf32>,
    return
  }
  func.func @transform_0(%arg0: i32, %arg1: memref<5xf32, #tpu.memory_space<smem>>) -> (i32, i32) {
    %c0_i32 = arith.constant 0 : i32
    %c0_i32_0 = arith.constant 0 : i32
    return %c0_i32, %arg0 : i32, i32
  }
  func.func @transform_1(%arg0: i32, %arg1: memref<5xf32, #tpu.memory_space<smem>>) -> (i32, i32) {
    %c0_i32 = arith.constant 0 : i32
    %c0_i32_0 = arith.constant 0 : i32
    return %c0_i32, %arg0 : i32, i32
  }
  func.func @transform_2(%arg0: i32, %arg1: memref<5xf32, #tpu.memory_space<smem>>) -> (i32, i32) {
    %c0_i32 = arith.constant 0 : i32
    %c0_i32_0 = arith.constant 0 : i32
    return %c0_i32, %arg0 : i32, i32
  }
}

</mosaic_0001>

<llo_original>
// kernel: tpu_custom_call.1
$region0: #{tpu_custom_call.1}
  #allocation0 [shape = 'u32[]', space=smem, size = 0x4, offset = 0x4, fixed_abs, tag = 'smem constant byte address 0x4 - core index']
  #allocation1 [shape = 'u32[144,128]{1,0:T(1,128)}', space=vmem, size = 0x12000, scoped, tag = 'internal scratch']
  #allocation2 [shape = 's32[1]{0}', space=sflag, size = 0x4, scoped, tag = 'scoped memory for tpu_custom_call.1']
  #allocation3 [shape = 'u8[512]{0}', space=smem, size = 0x200, scoped, tag = 'prefetched SMEM operand 0']
  %s0 = inlined_call_operand.hbm [shape: f32[5], index: 0, kind: input, shape index: {}]
  %s1 = inlined_call_operand.hbm [shape: f32[5,128], index: 1, kind: input, shape index: {}]
  %s2 = inlined_call_operand.vmem [shape: s32[1,128], index: 2, kind: input, shape index: {}]
  %s3 = inlined_call_operand.hbm [shape: f32[1,128], index: 3, kind: output, shape index: {}]
  %s4 = sld [smem:[#allocation0]]
  $region22: #{tpu_custom_call.1} parent=0
    _
  %s6 = ssub.s32 1, %s4
  %s7 = scalar_select 0, %s6, %s4
  %9 = dma.hbm_to_smem %s0, 16, [#allocation3], [#allocation2]
  %10 = dma.done [#allocation2], 16
  %11 = sfence
  $region1: #{tpu_custom_call.1} parent=0
    #allocation4 [shape = 'u8[4096]{0}', space=vmem, size = 0x1000, scoped, tag = 'input window, operand 1, single buffered']
    #allocation5 [shape = 's32[1]{0}', space=sflag, size = 0x4, scoped, tag = 'scoped memory for tpu_custom_call.1']
    #allocation6 [shape = 's32[1]{0}', space=sflag, size = 0x4, scoped, tag = 'scoped memory for tpu_custom_call.1']
    #allocation7 [shape = 'u8[512]{0}', space=vmem, size = 0x400, scoped, tag = 'output window, operand 0, single buffered']
    %12 = vsyncpa [#allocation5], 0
    %13 = vsyncpa [#allocation6], 0
    // Predicated region
    $region2: #{tpu_custom_call.1} parent=1 // pred_check
      _
    $region3: #{tpu_custom_call.1} parent=1 // pred_check_branch
      %15 = sbr.rel (0) target = $region5
    $region4: #{tpu_custom_call.1} parent=1 // pred_region
      %s17 = ssub.s32 128, 128
      %18 = vsyncadd [#allocation5], %s17
      %s20 = sshll.u32 [#allocation4], 4
      %s21 = int_to_ptr.vmem [resolvable:$true] %s20
      %23 = dma.hbm_to_vmem [thread:$0]  %s1, 128, %s21, [#allocation5]
    $region5: #{tpu_custom_call.1} parent=1 // pred_fallthru
      _
    // Predicated region
    $region6: #{tpu_custom_call.1} parent=1 // pred_check
      _
    $region7: #{tpu_custom_call.1} parent=1 // pred_check_branch
      %25 = sbr.rel (0) target = $region9
    $region8: #{tpu_custom_call.1} parent=1 // pred_region
      _
    $region9: #{tpu_custom_call.1} parent=1 // pred_fallthru
      _
    // Predicated region
    $region10: #{tpu_custom_call.1} parent=1 // pred_check
      _
    $region11: #{tpu_custom_call.1} parent=1 // pred_check_branch
      %27 = sbr.rel (0) target = $region13
    $region12: #{tpu_custom_call.1} parent=1 // pred_region
      %28 = dma.done [#allocation5], 128
    $region13: #{tpu_custom_call.1} parent=1 // pred_fallthru
      _
    %v29 = vld [vmem:[#allocation4] sm:$0x1f]
    %v30 = vld [vmem:[%s2] sm:$0x1]
    %vm31 = vcmask 1044480
    %v32 = vsel %vm31, %v29, -inf
    %v33 = vrot.slane %v32, 4
    %v34 = vmax.f32 %v32, %v33
    %v35 = vrot.slane %v34, 2
    %v36 = vmax.f32 %v34, %v35
    %v37 = vrot.slane %v36, 1
    %v38 = vmax.f32 %v36, %v37
    %v39 = vsub.f32 %v29, %v38
    %v40 = vmul.f32 %v39, 1.442695
    %v41 = vpow.pop %v40
    %v42 = vsel %vm31, %v41, 0.0
    %v43 = vrot.slane %v42, 4
    %v44 = vadd.f32 %v42, %v43
    %v45 = vrot.slane %v44, 2
    %v46 = vadd.f32 %v44, %v45
    %v47 = vrot.slane %v46, 1
    %v48 = vadd.f32 %v46, %v47
    %v49 = vlaneseq
    %v50 = vshrl.u32 %v49, 7
    %v51 = vlaneseq
    %v52 = vshrl.u32 %v51, 7
    %v53 = vsub.s32 0, %v52
    %v54 = vrot.slane %v30, %v53
    %vm55 = vcmp.eq.s32.totalorder %v50, %v54
    %v56 = vsel %vm55, %v41, 0.0
    %v57 = vsel %vm31, %v56, 0.0
    %v58 = vrot.slane %v57, 4
    %v59 = vadd.f32 %v57, %v58
    %v60 = vrot.slane %v59, 2
    %v61 = vadd.f32 %v59, %v60
    %v62 = vrot.slane %v61, 1
    %v63 = vadd.f32 %v61, %v62
    %vm64 = vcmp.eq.s32.totalorder %v30, 0
    %s65 = sld [smem:[#allocation3]]
    %v66 = vstv %s65
    %v67 = vsel %vm64, %v66, 0.0
    %vm68 = vcmp.eq.s32.totalorder %v30, 1
    %s69 = sld [smem:[#allocation3 + $0x1]]
    %v70 = vstv %s69
    %v71 = vsel %vm68, %v70, %v67
    %vm72 = vcmp.eq.s32.totalorder %v30, 2
    %s73 = sld [smem:[#allocation3 + $0x2]]
    %v74 = vstv %s73
    %v75 = vsel %vm72, %v74, %v71
    %vm76 = vcmp.eq.s32.totalorder %v30, 3
    %s77 = sld [smem:[#allocation3 + $0x3]]
    %v78 = vstv %s77
    %v79 = vsel %vm76, %v78, %v75
    %vm80 = vcmp.eq.s32.totalorder %v30, 4
    %s81 = sld [smem:[#allocation3 + $0x4]]
    %v82 = vstv %s81
    %v83 = vsel %vm80, %v82, %v79
    %v84 = vrcp.pop %v48
    %v85 = vmul.f32 %v48, %v84
    %v86 = vsub.f32 2.0, %v85
    %v87 = vmul.f32 %v84, %v86
    %v88 = vmul.f32 %v63, %v87
    %v89 = vadd.f32 %v88, 1e-06
    %v90 = vsub.f32 1.0, %v89
    %v91 = vmul.f32 %v90, %v90
    %v92 = vsub.f32 0.0, %v83
    %v93 = vmul.f32 %v92, %v91
    %v94 = vlog2.pop %v89
    %v95 = vmul.f32 %v94, 0.6931472
    %v96 = vmul.f32 %v93, %v95
    %97 = vst [vmem:[#allocation7] sm:$0x1] %v96
    // Predicated region
    $region14: #{tpu_custom_call.1} parent=1 // pred_check
      _
    $region15: #{tpu_custom_call.1} parent=1 // pred_check_branch
      %99 = sbr.rel (0) target = $region17
    $region16: #{tpu_custom_call.1} parent=1 // pred_region
      %s101 = ssub.s32 16, 16
      %102 = vsyncadd [#allocation6], %s101
      %s104 = sshll.u32 [#allocation7], 4
      %s105 = int_to_ptr.vmem [resolvable:$true] %s104
      %107 = dma.vmem_to_hbm [thread:$0]  %s105, 16, %s3, [#allocation6]
    $region17: #{tpu_custom_call.1} parent=1 // pred_fallthru
      _
    // Predicated region
    $region18: #{tpu_custom_call.1} parent=1 // pred_check
      _
    $region19: #{tpu_custom_call.1} parent=1 // pred_check_branch
      %109 = sbr.rel (0) target = $region21
    $region20: #{tpu_custom_call.1} parent=1 // pred_region
      %110 = dma.done [#allocation6], 16
    $region21: #{tpu_custom_call.1} parent=1 // pred_fallthru
      _
    %111 = vsyncpa [#allocation5], 1
    %112 = vsyncpa [#allocation6], 1

</llo_original>
